<compile_context>
chip_gen: v7x
topology: tpu7x:2x2x1
jax: 0.10.0
libtpu: 0.0.40
codegen_flags: <defaults>
</compile_context>

<pallas_src>
import jax
import jax.numpy as jnp
from jax import lax
from jax.experimental import pallas as pl
from jax.experimental.pallas import tpu as pltpu


# ----------------------------------------------------------------------------
# helpers
# ----------------------------------------------------------------------------
def _round_up(x, m):
    return (x + m - 1) // m * m


def _vmem_limit(block_bytes, slack=2 * 2**20, cap=48 * 2**20):
    # generous double-buffered estimate, clamped to be safe on v7x (64 MiB VMEM)
    return int(min(max(2 * block_bytes + slack, 8 * 2**20), cap))


# ----------------------------------------------------------------------------
# kernels
# ----------------------------------------------------------------------------
def gi_gates_kernel(x_ref, wr_ref, wz_ref, wn_ref, br_ref, bz_ref, bn_ref,
                    gr_ref, gz_ref, gn_ref):
    """Batched input-gate GEMM for all timesteps: gi_g = x @ W_ig + b_g."""
    x = x_ref[...]
    gr_ref[...] = jnp.dot(x, wr_ref[...], preferred_element_type=jnp.float32) + br_ref[...]
    gz_ref[...] = jnp.dot(x, wz_ref[...], preferred_element_type=jnp.float32) + bz_ref[...]
    gn_ref[...] = jnp.dot(x, wn_ref[...], preferred_element_type=jnp.float32) + bn_ref[...]


def gru_recurrence_kernel(len_ref, gir_ref, giz_ref, gin_ref, h0_ref,
                          whr_ref, whz_ref, whn_ref, bhn_ref,
                          y_ref, hN_ref):
    """Sequential GRU recurrence over one time chunk.

    len_ref : (Bp, 1) int32   per-batch valid lengths
    gi*_ref : (tt, Bp, H)     precomputed input-gate terms (bias folded in)
    h0_ref  : (Bp, H)         initial hidden
    wh*_ref : (H, H)          hidden->gate weights (r, z, n), pre-transposed
    bhn_ref : (1, H)          hidden bias of the n gate (kept separate per GRU formula)
    y_ref   : (tt, Bp, H)     masked per-step hidden outputs (streamed out)
    hN_ref  : (Bp, H)         carried hidden state (constant block -> accumulator)
    """
    tt = gir_ref.shape[0]
    chunk = pl.program_id(0)

    @pl.when(chunk == 0)
    def _init():
        hN_ref[...] = h0_ref[...]

    lengths = len_ref[...]          # (Bp, 1) int32
    bhn = bhn_ref[...]              # (1, H)
    t0 = chunk * tt

    def step(i, h):
        m = (lengths > (t0 + i)).astype(jnp.float32)          # (Bp, 1)
        gh_r = jnp.dot(h, whr_ref[...], preferred_element_type=jnp.float32)
        gh_z = jnp.dot(h, whz_ref[...], preferred_element_type=jnp.float32)
        gh_n = jnp.dot(h, whn_ref[...], preferred_element_type=jnp.float32) + bhn
        r = jax.nn.sigmoid(gir_ref[i] + gh_r)
        z = jax.nn.sigmoid(giz_ref[i] + gh_z)
        n = jnp.tanh(gin_ref[i] + r * gh_n)
        h_new = (1.0 - z) * n + z * h
        y_t = m * h_new                 # packed-sequence: zero rows past length
        y_ref[i] = y_t
        return y_t + (1.0 - m) * h      # hidden only advances while t < length

    hN_ref[...] = lax.fori_loop(0, tt, step, hN_ref[...])


def gemm_bias_kernel(x_ref, w_ref, b_ref, o_ref):
    """One (tm, K) x (K, tn) tile of the hoisted output projection."""
    o_ref[...] = (jnp.dot(x_ref[...], w_ref[...],
                          preferred_element_type=jnp.float32) + b_ref[...])


# ----------------------------------------------------------------------------
# pallas_call wrappers
# ----------------------------------------------------------------------------
def _input_gates(x2d, wr, wz, wn, br, bz, bn, *, tm_pref=512):
    M, H = x2d.shape
    if M <= tm_pref:
        tm, Mp = M, M
    else:
        tm = tm_pref
        Mp = _round_up(M, tm)
    xp = x2d if Mp == M else jnp.pad(x2d, ((0, Mp - M), (0, 0)))

    rows = pl.BlockSpec((tm, H), lambda i: (i, 0))
    full = lambda shape: pl.BlockSpec(shape, lambda i: (0, 0))

    outs = pl.pallas_call(
        gi_gates_kernel,
        out_shape=tuple(jax.ShapeDtypeStruct((Mp, H), jnp.float32) for _ in range(3)),
        grid_spec=pltpu.PrefetchScalarGridSpec(
            num_scalar_prefetch=0,
            grid=(Mp // tm,),
            in_specs=[rows,
                      full((H, H)), full((H, H)), full((H, H)),
                      full((1, H)), full((1, H)), full((1, H))],
            out_specs=(rows, rows, rows),
        ),
        compiler_params=pltpu.CompilerParams(
            dimension_semantics=("parallel",),
            vmem_limit_bytes=_vmem_limit((4 * tm * H + 3 * H * H + 3 * H) * 4),
        ),
    )(xp, wr, wz, wn, br, bz, bn)
    return tuple(o[:M] for o in outs)


def _gru_recurrence(lengths, gir, giz, gin, h0, whr, whz, whn, bhn, *, tt):
    Tp, Bp, H = gir.shape
    chunk = pl.BlockSpec((tt, Bp, H), lambda c: (c, 0, 0))
    full = lambda shape: pl.BlockSpec(shape, lambda c: (0, 0))

    y, hN = pl.pallas_call(
        gru_recurrence_kernel,
        out_shape=(jax.ShapeDtypeStruct((Tp, Bp, H), jnp.float32),
                   jax.ShapeDtypeStruct((Bp, H), jnp.float32)),
        grid_spec=pltpu.PrefetchScalarGridSpec(
            num_scalar_prefetch=0,
            grid=(Tp // tt,),
            in_specs=[full((Bp, 1)),
                      chunk, chunk, chunk,
                      full((Bp, H)),
                      full((H, H)), full((H, H)), full((H, H)),
                      full((1, H))],
            out_specs=(chunk, full((Bp, H))),
        ),
        compiler_params=pltpu.CompilerParams(
            dimension_semantics=("arbitrary",),   # sequential carry over time chunks
            vmem_limit_bytes=_vmem_limit(
                (4 * tt * Bp * H + 3 * H * H + 2 * Bp * H + Bp + H) * 4),
        ),
    )(lengths, gir, giz, gin, h0, whr, whz, whn, bhn)
    return y, hN


def _tiled_gemm_bias(x2d, w, b, *, tm_pref=256, tn_pref=512):
    """Grid-tiled (M, K) @ (K, N) + b with lane-dense output tiles."""
    M, K = x2d.shape
    N = w.shape[1]
    if M <= tm_pref:
        Mp = _round_up(M, 8)
        tm = Mp
    else:
        tm = tm_pref
        Mp = _round_up(M, tm)
    if N <= tn_pref:
        Np = _round_up(N, 128)
        tn = Np
    else:
        tn = tn_pref
        Np = _round_up(N, tn)

    xp = x2d if Mp == M else jnp.pad(x2d, ((0, Mp - M), (0, 0)))
    wp = w if Np == N else jnp.pad(w, ((0, 0), (0, Np - N)))
    bp = b if Np == N else jnp.pad(b, ((0, 0), (0, Np - N)))

    out = pl.pallas_call(
        gemm_bias_kernel,
        out_shape=jax.ShapeDtypeStruct((Mp, Np), jnp.float32),
        grid_spec=pltpu.PrefetchScalarGridSpec(
            num_scalar_prefetch=0,
            grid=(Mp // tm, Np // tn),
            in_specs=[pl.BlockSpec((tm, K), lambda i, j: (i, 0)),
                      pl.BlockSpec((K, tn), lambda i, j: (0, j)),
                      pl.BlockSpec((1, tn), lambda i, j: (0, j))],
            out_specs=pl.BlockSpec((tm, tn), lambda i, j: (i, j)),
        ),
        compiler_params=pltpu.CompilerParams(
            dimension_semantics=("parallel", "parallel"),  # shards across v7x's 2 TCs
            vmem_limit_bytes=_vmem_limit((tm * K + K * tn + tn + tm * tn) * 4),
        ),
    )(xp, wp, bp)
    return out[:M, :N]


# ----------------------------------------------------------------------------
# parameters & forward
# ----------------------------------------------------------------------------
def init_decoder_params(key, vocab_size, hidden_size):
    kE, k1, k2, k3, k4, k5, k6 = jax.random.split(key, 7)
    bound = 1.0 / jnp.sqrt(hidden_size)
    return {
        "embed": jax.random.normal(kE, (vocab_size, hidden_size), jnp.float32),
        # PyTorch GRU layout: (3H, H) / (3H,), gate order (r, z, n)
        "w_ih": jax.random.uniform(k1, (3 * hidden_size, hidden_size), jnp.float32, -bound, bound),
        "w_hh": jax.random.uniform(k2, (3 * hidden_size, hidden_size), jnp.float32, -bound, bound),
        "b_ih": jax.random.uniform(k3, (3 * hidden_size,), jnp.float32, -bound, bound),
        "b_hh": jax.random.uniform(k4, (3 * hidden_size,), jnp.float32, -bound, bound),
        # Linear: (V, H), (V,)
        "w_lin": jax.random.uniform(k5, (vocab_size, hidden_size), jnp.float32, -bound, bound),
        "b_lin": jax.random.uniform(k6, (vocab_size,), jnp.float32, -bound, bound),
    }


def decoder_forward(params, cnData, cnLength, hidden):
    """cnData: (B, Tpad) int32; cnLength: python list; hidden: (1, B, H).
    Returns (logits (B * T_max, V), hidden (1, B, H))."""
    B, _ = cnData.shape
    V, H = params["embed"].shape
    t_max = int(max(cnLength))

    # ---- glue (plain JAX): embedding lookup, dropout (eval) ----
    embed = jnp.take(params["embed"], cnData, axis=0)[:, :t_max, :].astype(jnp.float32)
    # TODO(synk): training-mode dropout (p=0.2) not modeled; eval-mode identity used.

    # Time-major; pad batch to multiple of 8 (sublanes), time to a chunk multiple.
    Bp = _round_up(B, 8)
    tt = t_max if t_max <= 32 else 16
    Tp = _round_up(t_max, tt)
    x = jnp.transpose(embed, (1, 0, 2))                               # (t_max, B, H)
    x = jnp.pad(x, ((0, Tp - t_max), (0, Bp - B), (0, 0)))            # (Tp, Bp, H)

    lengths = jnp.zeros((Bp, 1), jnp.int32).at[:B, 0].set(
        jnp.asarray(cnLength, jnp.int32))                             # padded rows: len 0
    h0 = jnp.pad(hidden[0].astype(jnp.float32), ((0, Bp - B), (0, 0)))  # (Bp, H)

    # ---- weight prep: per-gate, pre-transposed, biases folded where legal ----
    w_ih, w_hh = params["w_ih"], params["w_hh"]
    b_ih, b_hh = params["b_ih"], params["b_hh"]
    wih = [jnp.asarray(w_ih[g * H:(g + 1) * H].T, jnp.float32) for g in range(3)]
    whh = [jnp.asarray(w_hh[g * H:(g + 1) * H].T, jnp.float32) for g in range(3)]
    br = (b_ih[0:H] + b_hh[0:H]).reshape(1, H).astype(jnp.float32)        # r: b_ir + b_hr
    bz = (b_ih[H:2 * H] + b_hh[H:2 * H]).reshape(1, H).astype(jnp.float32)  # z: b_iz + b_hz
    bn_i = b_ih[2 * H:3 * H].reshape(1, H).astype(jnp.float32)            # n: b_in
    bn_h = b_hh[2 * H:3 * H].reshape(1, H).astype(jnp.float32)            # n: b_hn (stays in loop)

    # ---- 1) batched input-gate GEMM over all timesteps ----
    x2d = x.reshape(Tp * Bp, H)
    gir, giz, gin = _input_gates(x2d, wih[0], wih[1], wih[2], br, bz, bn_i)
    gir = gir.reshape(Tp, Bp, H)
    giz = giz.reshape(Tp, Bp, H)
    gin = gin.reshape(Tp, Bp, H)

    # ---- 2) sequential GRU recurrence, streamed over time chunks ----
    y, hN = _gru_recurrence(lengths, gir, giz, gin, h0,
                            whh[0], whh[1], whh[2], bn_h, tt=tt)

    # ---- 3) hoisted vocab projection: one tiled GEMM, output in (B*T, V) order ----
    # (transpose is on the small H-wide hidden, not on the large V-wide logits)
    y2d = jnp.transpose(y[:t_max, :B], (1, 0, 2)).reshape(B * t_max, H)
    wlin_t = jnp.asarray(params["w_lin"].T, jnp.float32)              # (H, V)
    blin = params["b_lin"].reshape(1, V).astype(jnp.float32)
    logits = _tiled_gemm_bias(y2d, wlin_t, blin)                      # (B*t_max, V)

    return logits, hN[:B][None, :, :]


# ----------------------------------------------------------------------------
# pure-JAX reference
# ----------------------------------------------------------------------------
def _reference_forward(params, cnData, cnLength, hidden):
    B, _ = cnData.shape
    V, H = params["embed"].shape
    t_max = int(max(cnLength))
    lengths = jnp.asarray(cnLength, jnp.int32)
    embed = jnp.take(params["embed"], cnData, axis=0)[:, :t_max, :]
    h = hidden[0]
    outs = []
    for t in range(t_max):
        x_t = embed[:, t, :]
        gi = x_t @ params["w_ih"].T + params["b_ih"]
        gh = h @ params["w_hh"].T + params["b_hh"]
        r = jax.nn.sigmoid(gi[:, :H] + gh[:, :H])
        z = jax.nn.sigmoid(gi[:, H:2 * H] + gh[:, H:2 * H])
        n = jnp.tanh(gi[:, 2 * H:] + r * gh[:, 2 * H:])
        h_new = (1 - z) * n + z * h
        m = (t < lengths).astype(jnp.float32)[:, None]
        h = m * h_new + (1 - m) * h
        outs.append(m * h_new)
    out = jnp.stack(outs, axis=1).reshape(B * t_max, H)
    logits = out @ params["w_lin"].T + params["b_lin"]
    return logits, h[None]


if __name__ == "__main__":
    VOCAB, HIDDEN = 64, 32
    B, T_PAD = 4, 8
    cnLength = [8, 6, 5, 3]   # variable lengths, max == T_PAD

    key = jax.random.PRNGKey(0)
    k_param, k_data, k_hid = jax.random.split(key, 3)

    params = init_decoder_params(k_param, VOCAB, HIDDEN)
    cnData = jax.random.randint(k_data, (B, T_PAD), 0, VOCAB, dtype=jnp.int32)
    hidden = jax.random.normal(k_hid, (1, B, HIDDEN), jnp.float32)

    logits, h_out = decoder_forward(params, cnData, cnLength, hidden)
    logits = jax.block_until_ready(logits)
    h_out = jax.block_until_ready(h_out)

    ref_logits, ref_h = _reference_forward(params, cnData, cnLength, hidden)
    assert logits.shape == (B * max(cnLength), VOCAB)
    assert h_out.shape == (1, B, HIDDEN)
    assert jnp.allclose(logits, ref_logits, atol=5e-4, rtol=5e-4)
    assert jnp.allclose(h_out, ref_h, atol=5e-4, rtol=5e-4)

    print("KERNEL_OK")
</pallas_src>

<mosaic_0001>
module attributes {stable_mosaic.version = 11 : i64} {
  func.func @gi_gates_kernel(%arg0: i32, %arg1: memref<64x32xf32, #tpu.memory_space<vmem>>, %arg2: memref<32x32xf32, #tpu.memory_space<vmem>>, %arg3: memref<32x32xf32, #tpu.memory_space<vmem>>, %arg4: memref<32x32xf32, #tpu.memory_space<vmem>>, %arg5: memref<1x32xf32, #tpu.memory_space<vmem>>, %arg6: memref<1x32xf32, #tpu.memory_space<vmem>>, %arg7: memref<1x32xf32, #tpu.memory_space<vmem>>, %arg8: memref<64x32xf32, #tpu.memory_space<vmem>>, %arg9: memref<64x32xf32, #tpu.memory_space<vmem>>, %arg10: memref<64x32xf32, #tpu.memory_space<vmem>>) attributes {dimension_semantics = [#tpu.dimension_semantics<parallel>], iteration_bounds = array<i64: 1>, scalar_prefetch = 0 : i64, scratch_operands = 0 : i64, tpu.core_type = #tpu.core_type<tc>, window_params = [{transform_indices = @transform_0, window_bounds = array<i64: 64, 32>}, {pipeline_mode = #tpu.pipeline_mode<synchronous>, transform_indices = @transform_1, window_bounds = array<i64: 32, 32>}, {pipeline_mode = #tpu.pipeline_mode<synchronous>, transform_indices = @transform_2, window_bounds = array<i64: 32, 32>}, {pipeline_mode = #tpu.pipeline_mode<synchronous>, transform_indices = @transform_3, window_bounds = array<i64: 32, 32>}, {pipeline_mode = #tpu.pipeline_mode<synchronous>, transform_indices = @transform_4, window_bounds = array<i64: 1, 32>}, {pipeline_mode = #tpu.pipeline_mode<synchronous>, transform_indices = @transform_5, window_bounds = array<i64: 1, 32>}, {pipeline_mode = #tpu.pipeline_mode<synchronous>, transform_indices = @transform_6, window_bounds = array<i64: 1, 32>}, {transform_indices = @transform_7, window_bounds = array<i64: 64, 32>}, {transform_indices = @transform_8, window_bounds = array<i64: 64, 32>}, {transform_indices = @transform_9, window_bounds = array<i64: 64, 32>}]} {
    %c0 = arith.constant 0 : index
    %c0_0 = arith.constant 0 : index
    %0 = vector.load %arg1[%c0, %c0_0] : memref<64x32xf32, #tpu.memory_space<vmem>>, vector<64x32xf32>
    %c0_1 = arith.constant 0 : index
    %c0_2 = arith.constant 0 : index
    %1 = vector.load %arg2[%c0_1, %c0_2] : memref<32x32xf32, #tpu.memory_space<vmem>>, vector<32x32xf32>
    %cst = arith.constant dense<0.000000e+00> : vector<64x32xf32>
    %2 = tpu.matmul %0, %1, %cst {dimension_numbers = #tpu.dot_dimension_numbers<[1], [0], [0], [1], [0, 0, 1, 1], [], []>} : vector<64x32xf32>, vector<32x32xf32>, vector<64x32xf32> -> vector<64x32xf32>
    %c0_3 = arith.constant 0 : index
    %c0_4 = arith.constant 0 : index
    %3 = vector.load %arg5[%c0_3, %c0_4] : memref<1x32xf32, #tpu.memory_space<vmem>>, vector<1x32xf32>
    %4 = vector.broadcast %3 : vector<1x32xf32> to vector<64x32xf32>
    %5 = arith.addf %2, %4 : vector<64x32xf32>
    %c0_5 = arith.constant 0 : index
    %c0_6 = arith.constant 0 : index
    %6 = vector.load %arg8[%c0_5, %c0_6] : memref<64x32xf32, #tpu.memory_space<vmem>>, vector<64x32xf32>
    tpu.vector_store %arg8[%c0_5, %c0_6], %5 {strides = array<i32>} : memref<64x32xf32, #tpu.memory_space<vmem>>, vector<64x32xf32>,
    %c0_7 = arith.constant 0 : index
    %c0_8 = arith.constant 0 : index
    %7 = vector.load %arg3[%c0_7, %c0_8] : memref<32x32xf32, #tpu.memory_space<vmem>>, vector<32x32xf32>
    %cst_9 = arith.constant dense<0.000000e+00> : vector<64x32xf32>
    %8 = tpu.matmul %0, %7, %cst_9 {dimension_numbers = #tpu.dot_dimension_numbers<[1], [0], [0], [1], [0, 0, 1, 1], [], []>} : vector<64x32xf32>, vector<32x32xf32>, vector<64x32xf32> -> vector<64x32xf32>
    %c0_10 = arith.constant 0 : index
    %c0_11 = arith.constant 0 : index
    %9 = vector.load %arg6[%c0_10, %c0_11] : memref<1x32xf32, #tpu.memory_space<vmem>>, vector<1x32xf32>
    %10 = vector.broadcast %9 : vector<1x32xf32> to vector<64x32xf32>
    %11 = arith.addf %8, %10 : vector<64x32xf32>
    %c0_12 = arith.constant 0 : index
    %c0_13 = arith.constant 0 : index
    %12 = vector.load %arg9[%c0_12, %c0_13] : memref<64x32xf32, #tpu.memory_space<vmem>>, vector<64x32xf32>
    tpu.vector_store %arg9[%c0_12, %c0_13], %11 {strides = array<i32>} : memref<64x32xf32, #tpu.memory_space<vmem>>, vector<64x32xf32>,
    %c0_14 = arith.constant 0 : index
    %c0_15 = arith.constant 0 : index
    %13 = vector.load %arg4[%c0_14, %c0_15] : memref<32x32xf32, #tpu.memory_space<vmem>>, vector<32x32xf32>
    %cst_16 = arith.constant dense<0.000000e+00> : vector<64x32xf32>
    %14 = tpu.matmul %0, %13, %cst_16 {dimension_numbers = #tpu.dot_dimension_numbers<[1], [0], [0], [1], [0, 0, 1, 1], [], []>} : vector<64x32xf32>, vector<32x32xf32>, vector<64x32xf32> -> vector<64x32xf32>
    %c0_17 = arith.constant 0 : index
    %c0_18 = arith.constant 0 : index
    %15 = vector.load %arg7[%c0_17, %c0_18] : memref<1x32xf32, #tpu.memory_space<vmem>>, vector<1x32xf32>
    %16 = vector.broadcast %15 : vector<1x32xf32> to vector<64x32xf32>
    %17 = arith.addf %14, %16 : vector<64x32xf32>
    %c0_19 = arith.constant 0 : index
    %c0_20 = arith.constant 0 : index
    %18 = vector.load %arg10[%c0_19, %c0_20] : memref<64x32xf32, #tpu.memory_space<vmem>>, vector<64x32xf32>
    tpu.vector_store %arg10[%c0_19, %c0_20], %17 {strides = array<i32>} : memref<64x32xf32, #tpu.memory_space<vmem>>, vector<64x32xf32>,
    return
  }
  func.func @transform_0(%arg0: i32) -> (i32, i32) {
    %c0_i32 = arith.constant 0 : i32
    %c0_i32_0 = arith.constant 0 : i32
    return %arg0, %c0_i32 : i32, i32
  }
  func.func @transform_1(%arg0: i32) -> (i32, i32) {
    %c0_i32 = arith.constant 0 : i32
    %c0_i32_0 = arith.constant 0 : i32
    %c0_i32_1 = arith.constant 0 : i32
    return %c0_i32, %c0_i32_0 : i32, i32
  }
  func.func @transform_2(%arg0: i32) -> (i32, i32) {
    %c0_i32 = arith.constant 0 : i32
    %c0_i32_0 = arith.constant 0 : i32
    %c0_i32_1 = arith.constant 0 : i32
    return %c0_i32, %c0_i32_0 : i32, i32
  }
  func.func @transform_3(%arg0: i32) -> (i32, i32) {
    %c0_i32 = arith.constant 0 : i32
    %c0_i32_0 = arith.constant 0 : i32
    %c0_i32_1 = arith.constant 0 : i32
    return %c0_i32, %c0_i32_0 : i32, i32
  }
  func.func @transform_4(%arg0: i32) -> (i32, i32) {
    %c0_i32 = arith.constant 0 : i32
    %c0_i32_0 = arith.constant 0 : i32
    %c0_i32_1 = arith.constant 0 : i32
    return %c0_i32, %c0_i32_0 : i32, i32
  }
  func.func @transform_5(%arg0: i32) -> (i32, i32) {
    %c0_i32 = arith.constant 0 : i32
    %c0_i32_0 = arith.constant 0 : i32
    %c0_i32_1 = arith.constant 0 : i32
    return %c0_i32, %c0_i32_0 : i32, i32
  }
  func.func @transform_6(%arg0: i32) -> (i32, i32) {
    %c0_i32 = arith.constant 0 : i32
    %c0_i32_0 = arith.constant 0 : i32
    %c0_i32_1 = arith.constant 0 : i32
    return %c0_i32, %c0_i32_0 : i32, i32
  }
  func.func @transform_7(%arg0: i32) -> (i32, i32) {
    %c0_i32 = arith.constant 0 : i32
    %c0_i32_0 = arith.constant 0 : i32
    return %arg0, %c0_i32 : i32, i32
  }
  func.func @transform_8(%arg0: i32) -> (i32, i32) {
    %c0_i32 = arith.constant 0 : i32
    %c0_i32_0 = arith.constant 0 : i32
    return %arg0, %c0_i32 : i32, i32
  }
  func.func @transform_9(%arg0: i32) -> (i32, i32) {
    %c0_i32 = arith.constant 0 : i32
    %c0_i32_0 = arith.constant 0 : i32
    return %arg0, %c0_i32 : i32, i32
  }
}

</mosaic_0001>

<llo_original>
// kernel: tpu_custom_call.1
$region0: #{tpu_custom_call.1}
  #allocation0 [shape = 'u32[]', space=smem, size = 0x4, offset = 0x4, fixed_abs, tag = 'smem constant byte address 0x4 - core index']
  #allocation1 [shape = 'u32[144,128]{1,0:T(1,128)}', space=vmem, size = 0x12000, scoped, tag = 'internal scratch']
  %s0 = inlined_call_operand.vmem [shape: f32[64,32], index: 0, kind: input, shape index: {}]
  %s1 = inlined_call_operand.vmem [shape: f32[32,32], index: 1, kind: input, shape index: {}]
  %s2 = inlined_call_operand.vmem [shape: f32[32,32], index: 2, kind: input, shape index: {}]
  %s3 = inlined_call_operand.vmem [shape: f32[32,32], index: 3, kind: input, shape index: {}]
  %s4 = inlined_call_operand.vmem [shape: f32[1,32], index: 4, kind: input, shape index: {}]
  %s5 = inlined_call_operand.vmem [shape: f32[1,32], index: 5, kind: input, shape index: {}]
  %s6 = inlined_call_operand.vmem [shape: f32[1,32], index: 6, kind: input, shape index: {}]
  %s7 = inlined_call_operand.vmem [shape: f32[64,32], index: 7, kind: output, shape index: {0}]
  %s8 = inlined_call_operand.vmem [shape: f32[64,32], index: 8, kind: output, shape index: {1}]
  %s9 = inlined_call_operand.vmem [shape: f32[64,32], index: 9, kind: output, shape index: {2}]
  %10 = xla_tuple %s7, %s8, %s9
  %s11 = sld [smem:[#allocation0]]
  $region54: #{tpu_custom_call.1} parent=0
    _
  %s13 = ssub.s32 1, %s11
  %s14 = scalar_select 0, %s13, %s11
  // Predicated region
  $region2: #{tpu_custom_call.1} parent=0 // pred_check
    _
  $region3: #{tpu_custom_call.1} parent=0 // pred_check_branch
    %16 = sbr.rel (0) target = $region5
  $region4: #{tpu_custom_call.1} parent=0 // pred_region
    _
  $region5: #{tpu_custom_call.1} parent=0 // pred_fallthru
    _
  // Predicated region
  $region6: #{tpu_custom_call.1} parent=0 // pred_check
    _
  $region7: #{tpu_custom_call.1} parent=0 // pred_check_branch
    %18 = sbr.rel (0) target = $region9
  $region8: #{tpu_custom_call.1} parent=0 // pred_region
    _
  $region9: #{tpu_custom_call.1} parent=0 // pred_fallthru
    _
  // Predicated region
  $region10: #{tpu_custom_call.1} parent=0 // pred_check
    _
  $region11: #{tpu_custom_call.1} parent=0 // pred_check_branch
    %20 = sbr.rel (0) target = $region13
  $region12: #{tpu_custom_call.1} parent=0 // pred_region
    _
  $region13: #{tpu_custom_call.1} parent=0 // pred_fallthru
    _
  // Predicated region
  $region14: #{tpu_custom_call.1} parent=0 // pred_check
    _
  $region15: #{tpu_custom_call.1} parent=0 // pred_check_branch
    %22 = sbr.rel (0) target = $region17
  $region16: #{tpu_custom_call.1} parent=0 // pred_region
    _
  $region17: #{tpu_custom_call.1} parent=0 // pred_fallthru
    _
  // Predicated region
  $region18: #{tpu_custom_call.1} parent=0 // pred_check
    _
  $region19: #{tpu_custom_call.1} parent=0 // pred_check_branch
    %24 = sbr.rel (0) target = $region21
  $region20: #{tpu_custom_call.1} parent=0 // pred_region
    _
  $region21: #{tpu_custom_call.1} parent=0 // pred_fallthru
    _
  // Predicated region
  $region22: #{tpu_custom_call.1} parent=0 // pred_check
    _
  $region23: #{tpu_custom_call.1} parent=0 // pred_check_branch
    %26 = sbr.rel (0) target = $region25
  $region24: #{tpu_custom_call.1} parent=0 // pred_region
    _
  $region25: #{tpu_custom_call.1} parent=0 // pred_fallthru
    _
  // Predicated region
  $region26: #{tpu_custom_call.1} parent=0 // pred_check
    _
  $region27: #{tpu_custom_call.1} parent=0 // pred_check_branch
    %28 = sbr.rel (0) target = $region29
  $region28: #{tpu_custom_call.1} parent=0 // pred_region
    _
  $region29: #{tpu_custom_call.1} parent=0 // pred_fallthru
    _
  %v29 = vld [vmem:[%s0] sm:$0xff]
  %v30 = vld [vmem:[%s0 + $0x8] sm:$0xff]
  %v31 = vld [vmem:[%s0 + $0x10] sm:$0xff]
  %v32 = vld [vmem:[%s0 + $0x18] sm:$0xff]
  %v33 = vld [vmem:[%s0 + $0x20] sm:$0xff]
  %v34 = vld [vmem:[%s0 + $0x28] sm:$0xff]
  %v35 = vld [vmem:[%s0 + $0x30] sm:$0xff]
  %v36 = vld [vmem:[%s0 + $0x38] sm:$0xff]
  %v37 = vld [vmem:[%s1] sm:$0xff]
  %v38 = vld [vmem:[%s1 + $0x8] sm:$0xff]
  %v39 = vld [vmem:[%s1 + $0x10] sm:$0xff]
  %v40 = vld [vmem:[%s1 + $0x18] sm:$0xff]
  %v41 = vld [vmem:[%s4] sm:$0x1]
  %v43 = vlaneseq
  %v44 = vshrl.u32 %v43, 7
  %v45 = vsub.s32 0, %v44
  %v46 = vrot.slane %v41, %v45
  %vm48 = vcmask 261120
  %v50 = vsel %vm48, %v29, 0
  %v53 = vsel %vm48, %v30, 0
  %v56 = vsel %vm48, %v31, 0
  %v59 = vsel %vm48, %v32, 0
  %v62 = vsel %vm48, %v33, 0
  %v65 = vsel %vm48, %v34, 0
  %v68 = vsel %vm48, %v35, 0
  %v71 = vsel %vm48, %v36, 0
  %73 = vmatprep.subr.mxu0 0.0
  %74 = vmatpush1.msra.mxu0 %v37
  %75 = vmatprep.subr.mxu0 0.0
  %76 = vmatpush1.msra.mxu0 %v38
  %77 = vmatprep.subr.mxu0 0.0
  %78 = vmatpush1.msra.mxu0 %v39
  %79 = vmatprep.subr.mxu0 0.0
  %80 = vmatpush1.msra.mxu0 %v40
  %81 = vmatprep.subr.mxu0 0.0
  %82 = vmatpush1.msra.mxu0 0.0
  %83 = vmatprep.subr.mxu0 0.0
  %84 = vmatpush1.msra.mxu0 0.0
  %85 = vmatprep.subr.mxu0 0.0
  %86 = vmatpush1.msra.mxu0 0.0
  %87 = vmatprep.subr.mxu0 0.0
  %88 = vmatpush1.msra.mxu0 0.0
  %89 = vmatprep.subr.mxu0 0.0
  %90 = vmatpush1.msra.mxu0 0.0
  %91 = vmatprep.subr.mxu0 0.0
  %92 = vmatpush1.msra.mxu0 0.0
  %93 = vmatprep.subr.mxu0 0.0
  %94 = vmatpush1.msra.mxu0 0.0
  %95 = vmatprep.subr.mxu0 0.0
  %96 = vmatpush1.msra.mxu0 0.0
  %97 = vmatprep.subr.mxu0 0.0
  %98 = vmatpush1.msra.mxu0 0.0
  %99 = vmatprep.subr.mxu0 0.0
  %100 = vmatpush1.msra.mxu0 0.0
  %101 = vmatprep.subr.mxu0 0.0
  %102 = vmatpush1.msra.mxu0 0.0
  %103 = vmatprep.subr.mxu0 0.0
  %104 = vmatpush1.msra.mxu0 0.0
  %105 = vmatprep.subr.mxu0 0.0
  %106 = vmatpush1.msra.mxu0 0.0
  %107 = vmatprep.subr.mxu0 0.0
  %108 = vmatpush1.msra.mxu0 0.0
  %109 = vmatprep.subr.mxu0 0.0
  %110 = vmatpush1.msra.mxu0 0.0
  %111 = vmatprep.subr.mxu0 0.0
  %112 = vmatpush1.msra.mxu0 0.0
  %113 = vmatprep.subr.mxu0 0.0
  %114 = vmatpush1.msra.mxu0 0.0
  %115 = vmatprep.subr.mxu0 0.0
  %116 = vmatpush1.msra.mxu0 0.0
  %117 = vmatprep.subr.mxu0 0.0
  %118 = vmatpush1.msra.mxu0 0.0
  %119 = vmatprep.subr.mxu0 0.0
  %120 = vmatpush1.msra.mxu0 0.0
  %121 = vmatprep.subr.mxu0 0.0
  %122 = vmatpush1.msra.mxu0 0.0
  %123 = vmatprep.subr.mxu0 0.0
  %124 = vmatpush1.msra.mxu0 0.0
  %125 = vmatprep.subr.mxu0 0.0
  %126 = vmatpush1.msra.mxu0 0.0
  %127 = vmatprep.subr.mxu0 0.0
  %128 = vmatpush1.msra.mxu0 0.0
  %129 = vmatprep.subr.mxu0 0.0
  %130 = vmatpush1.msra.mxu0 0.0
  %131 = vmatprep.subr.mxu0 0.0
  %132 = vmatpush1.msra.mxu0 0.0
  %133 = vmatprep.subr.mxu0 0.0
  %134 = vmatpush1.msra.mxu0 0.0
  %135 = vmatprep.subr.mxu0 0.0
  %136 = vmatpush1.msra.mxu0 0.0
  %137 = vmatprep.mubr.f32.mxu0 0.0
  %138 = vmatmul.mubr.f32.gmra.mrb[0].mxu0 %v50
  %v139 = vpop.f32.mrb[0].mxu0
  %v140 = vadd.f32 %v46, %v139
  %v141 = vpop.f32.mrb[0].mxu0
  %142 = vmatprep.mubr.f32.mxu0 0.0
  %143 = vmatmul.mubr.f32.gmra.mrb[0].mxu0 %v53
  %v144 = vpop.f32.mrb[0].mxu0
  %v145 = vadd.f32 %v46, %v144
  %v146 = vpop.f32.mrb[0].mxu0
  %147 = vmatprep.mubr.f32.mxu0 0.0
  %148 = vmatmul.mubr.f32.gmra.mrb[0].mxu0 %v56
  %v149 = vpop.f32.mrb[0].mxu0
  %v150 = vadd.f32 %v46, %v149
  %v151 = vpop.f32.mrb[0].mxu0
  %152 = vmatprep.mubr.f32.mxu0 0.0
  %153 = vmatmul.mubr.f32.gmra.mrb[0].mxu0 %v59
  %v154 = vpop.f32.mrb[0].mxu0
  %v155 = vadd.f32 %v46, %v154
  %v156 = vpop.f32.mrb[0].mxu0
  %157 = vmatprep.mubr.f32.mxu0 0.0
  %158 = vmatmul.mubr.f32.gmra.mrb[0].mxu0 %v62
  %v159 = vpop.f32.mrb[0].mxu0
  %v160 = vadd.f32 %v46, %v159
  %v161 = vpop.f32.mrb[0].mxu0
  %162 = vmatprep.mubr.f32.mxu0 0.0
  %163 = vmatmul.mubr.f32.gmra.mrb[0].mxu0 %v65
  %v164 = vpop.f32.mrb[0].mxu0
  %v165 = vadd.f32 %v46, %v164
  %v166 = vpop.f32.mrb[0].mxu0
  %167 = vmatprep.mubr.f32.mxu0 0.0
  %168 = vmatmul.mubr.f32.gmra.mrb[0].mxu0 %v68
  %v169 = vpop.f32.mrb[0].mxu0
  %v170 = vadd.f32 %v46, %v169
  %v171 = vpop.f32.mrb[0].mxu0
  %172 = vmatprep.mubr.f32.mxu0 0.0
  %173 = vmatmul.mubr.f32.gmra.mrb[0].mxu0 %v71
  %v174 = vpop.f32.mrb[0].mxu0
  %v175 = vadd.f32 %v46, %v174
  %v176 = vpop.f32.mrb[0].mxu0
  %177 = vdwg.mxu0
  %178 = vst.msk [vmem:[%s7] sm:$0xff] %vm48, %v140
  %179 = vst.msk [vmem:[%s7 + $0x8] sm:$0xff] %vm48, %v145
  %180 = vst.msk [vmem:[%s7 + $0x10] sm:$0xff] %vm48, %v150
  %181 = vst.msk [vmem:[%s7 + $0x18] sm:$0xff] %vm48, %v155
  %182 = vst.msk [vmem:[%s7 + $0x20] sm:$0xff] %vm48, %v160
  %183 = vst.msk [vmem:[%s7 + $0x28] sm:$0xff] %vm48, %v165
  %184 = vst.msk [vmem:[%s7 + $0x30] sm:$0xff] %vm48, %v170
  %185 = vst.msk [vmem:[%s7 + $0x38] sm:$0xff] %vm48, %v175
  %v186 = vld [vmem:[%s2] sm:$0xff]
  %v187 = vld [vmem:[%s2 + $0x8] sm:$0xff]
  %v188 = vld [vmem:[%s2 + $0x10] sm:$0xff]
  %v189 = vld [vmem:[%s2 + $0x18] sm:$0xff]
  %v190 = vld [vmem:[%s5] sm:$0x1]
  %v192 = vlaneseq
  %v193 = vshrl.u32 %v192, 7
  %v194 = vsub.s32 0, %v193
  %v195 = vrot.slane %v190, %v194
  %197 = vmatprep.subr.mxu0 0.0
  %198 = vmatpush1.msra.mxu0 %v186
  %199 = vmatprep.subr.mxu0 0.0
  %200 = vmatpush1.msra.mxu0 %v187
  %201 = vmatprep.subr.mxu0 0.0
  %202 = vmatpush1.msra.mxu0 %v188
  %203 = vmatprep.subr.mxu0 0.0
  %204 = vmatpush1.msra.mxu0 %v189
  %205 = vmatprep.subr.mxu0 0.0
  %206 = vmatpush1.msra.mxu0 0.0
  %207 = vmatprep.subr.mxu0 0.0
  %208 = vmatpush1.msra.mxu0 0.0
  %209 = vmatprep.subr.mxu0 0.0
  %210 = vmatpush1.msra.mxu0 0.0
  %211 = vmatprep.subr.mxu0 0.0
  %212 = vmatpush1.msra.mxu0 0.0
  %213 = vmatprep.subr.mxu0 0.0
  %214 = vmatpush1.msra.mxu0 0.0
  %215 = vmatprep.subr.mxu0 0.0
  %216 = vmatpush1.msra.mxu0 0.0
  %217 = vmatprep.subr.mxu0 0.0
  %218 = vmatpush1.msra.mxu0 0.0
  %219 = vmatprep.subr.mxu0 0.0
  %220 = vmatpush1.msra.mxu0 0.0
  %221 = vmatprep.subr.mxu0 0.0
  %222 = vmatpush1.msra.mxu0 0.0
  %223 = vmatprep.subr.mxu0 0.0
  %224 = vmatpush1.msra.mxu0 0.0
  %225 = vmatprep.subr.mxu0 0.0
  %226 = vmatpush1.msra.mxu0 0.0
  %227 = vmatprep.subr.mxu0 0.0
  %228 = vmatpush1.msra.mxu0 0.0
  %229 = vmatprep.subr.mxu0 0.0
  %230 = vmatpush1.msra.mxu0 0.0
  %231 = vmatprep.subr.mxu0 0.0
  %232 = vmatpush1.msra.mxu0 0.0
  %233 = vmatprep.subr.mxu0 0.0
  %234 = vmatpush1.msra.mxu0 0.0
  %235 = vmatprep.subr.mxu0 0.0
  %236 = vmatpush1.msra.mxu0 0.0
  %237 = vmatprep.subr.mxu0 0.0
  %238 = vmatpush1.msra.mxu0 0.0
  %239 = vmatprep.subr.mxu0 0.0
  %240 = vmatpush1.msra.mxu0 0.0
  %241 = vmatprep.subr.mxu0 0.0
  %242 = vmatpush1.msra.mxu0 0.0
  %243 = vmatprep.subr.mxu0 0.0
  %244 = vmatpush1.msra.mxu0 0.0
  %245 = vmatprep.subr.mxu0 0.0
  %246 = vmatpush1.msra.mxu0 0.0
  %247 = vmatprep.subr.mxu0 0.0
  %248 = vmatpush1.msra.mxu0 0.0
  %249 = vmatprep.subr.mxu0 0.0
  %250 = vmatpush1.msra.mxu0 0.0
  %251 = vmatprep.subr.mxu0 0.0
  %252 = vmatpush1.msra.mxu0 0.0
  %253 = vmatprep.subr.mxu0 0.0
  %254 = vmatpush1.msra.mxu0 0.0
  %255 = vmatprep.subr.mxu0 0.0
  %256 = vmatpush1.msra.mxu0 0.0
  %257 = vmatprep.subr.mxu0 0.0
  %258 = vmatpush1.msra.mxu0 0.0
  %259 = vmatprep.subr.mxu0 0.0
  %260 = vmatpush1.msra.mxu0 0.0
  %261 = vmatprep.mubr.f32.mxu0 0.0
  %262 = vmatmul.mubr.f32.gmra.mrb[0].mxu0 %v50
  %v263 = vpop.f32.mrb[0].mxu0
  %v264 = vadd.f32 %v195, %v263
  %v265 = vpop.f32.mrb[0].mxu0
  %266 = vmatprep.mubr.f32.mxu0 0.0
  %267 = vmatmul.mubr.f32.gmra.mrb[0].mxu0 %v53
  %v268 = vpop.f32.mrb[0].mxu0
  %v269 = vadd.f32 %v195, %v268
  %v270 = vpop.f32.mrb[0].mxu0
  %271 = vmatprep.mubr.f32.mxu0 0.0
  %272 = vmatmul.mubr.f32.gmra.mrb[0].mxu0 %v56
  %v273 = vpop.f32.mrb[0].mxu0
  %v274 = vadd.f32 %v195, %v273
  %v275 = vpop.f32.mrb[0].mxu0
  %276 = vmatprep.mubr.f32.mxu0 0.0
  %277 = vmatmul.mubr.f32.gmra.mrb[0].mxu0 %v59
  %v278 = vpop.f32.mrb[0].mxu0
  %v279 = vadd.f32 %v195, %v278
  %v280 = vpop.f32.mrb[0].mxu0
  %281 = vmatprep.mubr.f32.mxu0 0.0
  %282 = vmatmul.mubr.f32.gmra.mrb[0].mxu0 %v62
  %v283 = vpop.f32.mrb[0].mxu0
  %v284 = vadd.f32 %v195, %v283
  %v285 = vpop.f32.mrb[0].mxu0
  %286 = vmatprep.mubr.f32.mxu0 0.0
  %287 = vmatmul.mubr.f32.gmra.mrb[0].mxu0 %v65
  %v288 = vpop.f32.mrb[0].mxu0
  %v289 = vadd.f32 %v195, %v288
  %v290 = vpop.f32.mrb[0].mxu0
  %291 = vmatprep.mubr.f32.mxu0 0.0
  %292 = vmatmul.mubr.f32.gmra.mrb[0].mxu0 %v68
  %v293 = vpop.f32.mrb[0].mxu0
  %v294 = vadd.f32 %v195, %v293
  %v295 = vpop.f32.mrb[0].mxu0
  %296 = vmatprep.mubr.f32.mxu0 0.0
  %297 = vmatmul.mubr.f32.gmra.mrb[0].mxu0 %v71
  %v298 = vpop.f32.mrb[0].mxu0
  %v299 = vadd.f32 %v195, %v298
  %v300 = vpop.f32.mrb[0].mxu0
  %301 = vdwg.mxu0
  %302 = vst.msk [vmem:[%s8] sm:$0xff] %vm48, %v264
  %303 = vst.msk [vmem:[%s8 + $0x8] sm:$0xff] %vm48, %v269
  %304 = vst.msk [vmem:[%s8 + $0x10] sm:$0xff] %vm48, %v274
  %305 = vst.msk [vmem:[%s8 + $0x18] sm:$0xff] %vm48, %v279
  %306 = vst.msk [vmem:[%s8 + $0x20] sm:$0xff] %vm48, %v284
  %307 = vst.msk [vmem:[%s8 + $0x28] sm:$0xff] %vm48, %v289
  %308 = vst.msk [vmem:[%s8 + $0x30] sm:$0xff] %vm48, %v294
  %309 = vst.msk [vmem:[%s8 + $0x38] sm:$0xff] %vm48, %v299
  %v310 = vld [vmem:[%s3] sm:$0xff]
  %v311 = vld [vmem:[%s3 + $0x8] sm:$0xff]
  %v312 = vld [vmem:[%s3 + $0x10] sm:$0xff]
  %v313 = vld [vmem:[%s3 + $0x18] sm:$0xff]
  %v314 = vld [vmem:[%s6] sm:$0x1]
  %v316 = vlaneseq
  %v317 = vshrl.u32 %v316, 7
  %v318 = vsub.s32 0, %v317
  %v319 = vrot.slane %v314, %v318
  %321 = vmatprep.subr.mxu0 0.0
  %322 = vmatpush1.msra.mxu0 %v310
  %323 = vmatprep.subr.mxu0 0.0
  %324 = vmatpush1.msra.mxu0 %v311
  %325 = vmatprep.subr.mxu0 0.0
  %326 = vmatpush1.msra.mxu0 %v312
  %327 = vmatprep.subr.mxu0 0.0
  %328 = vmatpush1.msra.mxu0 %v313
  %329 = vmatprep.subr.mxu0 0.0
  %330 = vmatpush1.msra.mxu0 0.0
  %331 = vmatprep.subr.mxu0 0.0
  %332 = vmatpush1.msra.mxu0 0.0
  %333 = vmatprep.subr.mxu0 0.0
  %334 = vmatpush1.msra.mxu0 0.0
  %335 = vmatprep.subr.mxu0 0.0
  %336 = vmatpush1.msra.mxu0 0.0
  %337 = vmatprep.subr.mxu0 0.0
  %338 = vmatpush1.msra.mxu0 0.0
  %339 = vmatprep.subr.mxu0 0.0
  %340 = vmatpush1.msra.mxu0 0.0
  %341 = vmatprep.subr.mxu0 0.0
  %342 = vmatpush1.msra.mxu0 0.0
  %343 = vmatprep.subr.mxu0 0.0
  %344 = vmatpush1.msra.mxu0 0.0
  %345 = vmatprep.subr.mxu0 0.0
  %346 = vmatpush1.msra.mxu0 0.0
  %347 = vmatprep.subr.mxu0 0.0
  %348 = vmatpush1.msra.mxu0 0.0
  %349 = vmatprep.subr.mxu0 0.0
  %350 = vmatpush1.msra.mxu0 0.0
  %351 = vmatprep.subr.mxu0 0.0
  %352 = vmatpush1.msra.mxu0 0.0
  %353 = vmatprep.subr.mxu0 0.0
  %354 = vmatpush1.msra.mxu0 0.0
  %355 = vmatprep.subr.mxu0 0.0
  %356 = vmatpush1.msra.mxu0 0.0
  %357 = vmatprep.subr.mxu0 0.0
  %358 = vmatpush1.msra.mxu0 0.0
  %359 = vmatprep.subr.mxu0 0.0
  %360 = vmatpush1.msra.mxu0 0.0
  %361 = vmatprep.subr.mxu0 0.0
  %362 = vmatpush1.msra.mxu0 0.0
  %363 = vmatprep.subr.mxu0 0.0
  %364 = vmatpush1.msra.mxu0 0.0
  %365 = vmatprep.subr.mxu0 0.0
  %366 = vmatpush1.msra.mxu0 0.0
  %367 = vmatprep.subr.mxu0 0.0
  %368 = vmatpush1.msra.mxu0 0.0
  %369 = vmatprep.subr.mxu0 0.0
  %370 = vmatpush1.msra.mxu0 0.0
  %371 = vmatprep.subr.mxu0 0.0
  %372 = vmatpush1.msra.mxu0 0.0
  %373 = vmatprep.subr.mxu0 0.0
  %374 = vmatpush1.msra.mxu0 0.0
  %375 = vmatprep.subr.mxu0 0.0
  %376 = vmatpush1.msra.mxu0 0.0
  %377 = vmatprep.subr.mxu0 0.0
  %378 = vmatpush1.msra.mxu0 0.0
  %379 = vmatprep.subr.mxu0 0.0
  %380 = vmatpush1.msra.mxu0 0.0
  %381 = vmatprep.subr.mxu0 0.0
  %382 = vmatpush1.msra.mxu0 0.0
  %383 = vmatprep.subr.mxu0 0.0
  %384 = vmatpush1.msra.mxu0 0.0
  %385 = vmatprep.mubr.f32.mxu0 0.0
  %386 = vmatmul.mubr.f32.gmra.mrb[0].mxu0 %v50
  %v387 = vpop.f32.mrb[0].mxu0
  %v388 = vadd.f32 %v319, %v387
  %v389 = vpop.f32.mrb[0].mxu0
  %390 = vmatprep.mubr.f32.mxu0 0.0
  %391 = vmatmul.mubr.f32.gmra.mrb[0].mxu0 %v53
  %v392 = vpop.f32.mrb[0].mxu0
  %v393 = vadd.f32 %v319, %v392
  %v394 = vpop.f32.mrb[0].mxu0
  %395 = vmatprep.mubr.f32.mxu0 0.0
  %396 = vmatmul.mubr.f32.gmra.mrb[0].mxu0 %v56
  %v397 = vpop.f32.mrb[0].mxu0
  %v398 = vadd.f32 %v319, %v397
  %v399 = vpop.f32.mrb[0].mxu0
  %400 = vmatprep.mubr.f32.mxu0 0.0
  %401 = vmatmul.mubr.f32.gmra.mrb[0].mxu0 %v59
  %v402 = vpop.f32.mrb[0].mxu0
  %v403 = vadd.f32 %v319, %v402
  %v404 = vpop.f32.mrb[0].mxu0
  %405 = vmatprep.mubr.f32.mxu0 0.0
  %406 = vmatmul.mubr.f32.gmra.mrb[0].mxu0 %v62
  %v407 = vpop.f32.mrb[0].mxu0
  %v408 = vadd.f32 %v319, %v407
  %v409 = vpop.f32.mrb[0].mxu0
  %410 = vmatprep.mubr.f32.mxu0 0.0
  %411 = vmatmul.mubr.f32.gmra.mrb[0].mxu0 %v65
  %v412 = vpop.f32.mrb[0].mxu0
  %v413 = vadd.f32 %v319, %v412
  %v414 = vpop.f32.mrb[0].mxu0
  %415 = vmatprep.mubr.f32.mxu0 0.0
  %416 = vmatmul.mubr.f32.gmra.mrb[0].mxu0 %v68
  %v417 = vpop.f32.mrb[0].mxu0
  %v418 = vadd.f32 %v319, %v417
  %v419 = vpop.f32.mrb[0].mxu0
  %420 = vmatprep.mubr.f32.mxu0 0.0
  %421 = vmatmul.mubr.f32.gmra.mrb[0].mxu0 %v71
  %v422 = vpop.f32.mrb[0].mxu0
  %v423 = vadd.f32 %v319, %v422
  %v424 = vpop.f32.mrb[0].mxu0
  %425 = vdwg.mxu0
  %426 = vst.msk [vmem:[%s9] sm:$0xff] %vm48, %v388
  %427 = vst.msk [vmem:[%s9 + $0x8] sm:$0xff] %vm48, %v393
  %428 = vst.msk [vmem:[%s9 + $0x10] sm:$0xff] %vm48, %v398
  %429 = vst.msk [vmem:[%s9 + $0x18] sm:$0xff] %vm48, %v403
  %430 = vst.msk [vmem:[%s9 + $0x20] sm:$0xff] %vm48, %v408
  %431 = vst.msk [vmem:[%s9 + $0x28] sm:$0xff] %vm48, %v413
  %432 = vst.msk [vmem:[%s9 + $0x30] sm:$0xff] %vm48, %v418
  %433 = vst.msk [vmem:[%s9 + $0x38] sm:$0xff] %vm48, %v423
  // Predicated region
  $region30: #{tpu_custom_call.1} parent=0 // pred_check
    _
  $region31: #{tpu_custom_call.1} parent=0 // pred_check_branch
    %435 = sbr.rel (0) target = $region33
  $region32: #{tpu_custom_call.1} parent=0 // pred_region
    _
  $region33: #{tpu_custom_call.1} parent=0 // pred_fallthru
    _
  // Predicated region
  $region34: #{tpu_custom_call.1} parent=0 // pred_check
    _
  $region35: #{tpu_custom_call.1} parent=0 // pred_check_branch
    %437 = sbr.rel (0) target = $region37
  $region36: #{tpu_custom_call.1} parent=0 // pred_region
    _
  $region37: #{tpu_custom_call.1} parent=0 // pred_fallthru
    _
  // Predicated region
  $region38: #{tpu_custom_call.1} parent=0 // pred_check
    _
  $region39: #{tpu_custom_call.1} parent=0 // pred_check_branch
    %439 = sbr.rel (0) target = $region41
  $region40: #{tpu_custom_call.1} parent=0 // pred_region
    _
  $region41: #{tpu_custom_call.1} parent=0 // pred_fallthru
    _
  // Predicated region
  $region42: #{tpu_custom_call.1} parent=0 // pred_check
    _
  $region43: #{tpu_custom_call.1} parent=0 // pred_check_branch
    %441 = sbr.rel (0) target = $region45
  $region44: #{tpu_custom_call.1} parent=0 // pred_region
    _
  $region45: #{tpu_custom_call.1} parent=0 // pred_fallthru
    _
  // Predicated region
  $region46: #{tpu_custom_call.1} parent=0 // pred_check
    _
  $region47: #{tpu_custom_call.1} parent=0 // pred_check_branch
    %443 = sbr.rel (0) target = $region49
  $region48: #{tpu_custom_call.1} parent=0 // pred_region
    _
  $region49: #{tpu_custom_call.1} parent=0 // pred_fallthru
    _
  // Predicated region
  $region50: #{tpu_custom_call.1} parent=0 // pred_check
    _
  $region51: #{tpu_custom_call.1} parent=0 // pred_check_branch
    %445 = sbr.rel (0) target = $region53
  $region52: #{tpu_custom_call.1} parent=0 // pred_region
    _
  $region53: #{tpu_custom_call.1} parent=0 // pred_fallthru
    _

</llo_original>
